<compile_context>
chip_gen: v6e
topology: v6e:2x2x1
jax: 0.10.0
libtpu: 0.0.40
codegen_flags: <defaults>
</compile_context>

<pallas_src>
import functools

import jax
import jax.numpy as jnp
from jax.experimental import pallas as pl
from jax.experimental.pallas import tpu as pltpu

LN_EPS = 1e-5          # custom LayerNorm default eps (added to std, not var)
LRELU_SLOPE = 0.2
COMPUTE_DTYPE = jnp.bfloat16   # MXU operand dtype; accumulation is always f32


# ----------------------------------------------------------------------------
# Fused Pallas kernel: matmul + bias + (LayerNorm) + activation
# ----------------------------------------------------------------------------
def _linear_block_kernel(*refs, norm, activation):
    if norm == 'ln':
        x_ref, w_ref, b_ref, g_ref, bt_ref, o_ref = refs
    else:
        x_ref, w_ref, b_ref, o_ref = refs

    # MXU matmul (bf16 operands, f32 accumulation) + bias, all VMEM-resident.
    y = jnp.dot(x_ref[...], w_ref[...], preferred_element_type=jnp.float32)
    y = y + b_ref[...]                                # (tm, N) + (1, N)

    if norm == 'ln':
        # MUNIT LayerNorm: per-sample mean / *unbiased* std over all features,
        # x = (x - mean) / (std + eps), then per-feature affine (gamma, beta).
        # Note: bias does NOT cancel here (mean is over features), so it is kept.
        n = y.shape[1]
        mean = jnp.mean(y, axis=1, keepdims=True)
        yc = y - mean
        var = jnp.sum(yc * yc, axis=1, keepdims=True) / (n - 1)
        y = yc / (jnp.sqrt(var) + LN_EPS)
        y = y * g_ref[...] + bt_ref[...]

    if activation == 'relu':
        y = jnp.maximum(y, 0.0)
    elif activation == 'lrelu':
        y = jnp.where(y > 0, y, LRELU_SLOPE * y)
    elif activation == 'tanh':
        y = jnp.tanh(y)
    elif activation == 'none':
        pass
    else:
        raise NotImplementedError(f"activation={activation}")

    o_ref[...] = y.astype(o_ref.dtype)


# ----------------------------------------------------------------------------
# Wrapper
# ----------------------------------------------------------------------------
def linear_block(x, params, *, norm='none', activation='relu', block_m=128):
    """x: (M, K) f32; params['w']: (N, K) PyTorch layout; params['b']: (N,)."""
    if norm not in ('none', 'ln'):
        raise NotImplementedError(f"norm={norm}")

    M, K = x.shape
    N = params['w'].shape[0]

    # Lane-dense weight layout: (K, N) with output features on the lane axis.
    w_t = jnp.transpose(params['w']).astype(COMPUTE_DTYPE)      # (K, N)
    x_c = x.astype(COMPUTE_DTYPE)                               # (M, K)
    b = params['b'].reshape(1, N).astype(jnp.float32)

    tm = min(block_m, M)
    grid = (pl.cdiv(M, tm),)

    in_arrays = [x_c, w_t, b]
    in_specs = [
        pl.BlockSpec((tm, K), lambda i: (i, 0)),    # batch tile
        pl.BlockSpec((K, N), lambda i: (0, 0)),     # full weight, resident
        pl.BlockSpec((1, N), lambda i: (0, 0)),     # bias
    ]
    if norm == 'ln':
        in_arrays += [params['gamma'].reshape(1, N).astype(jnp.float32),
                      params['beta'].reshape(1, N).astype(jnp.float32)]
        in_specs += [pl.BlockSpec((1, N), lambda i: (0, 0)),
                     pl.BlockSpec((1, N), lambda i: (0, 0))]

    return pl.pallas_call(
        functools.partial(_linear_block_kernel, norm=norm, activation=activation),
        out_shape=jax.ShapeDtypeStruct((M, N), jnp.float32),
        grid_spec=pltpu.PrefetchScalarGridSpec(
            num_scalar_prefetch=0,
            grid=grid,
            in_specs=in_specs,
            out_specs=pl.BlockSpec((tm, N), lambda i: (i, 0)),
        ),
        compiler_params=pltpu.CompilerParams(
            dimension_semantics=("parallel",)),     # shard batch tiles across TCs (v7x)
    )(*in_arrays)


# ----------------------------------------------------------------------------
# Deterministic parameter init (PyTorch nn.Linear default init) + f32 reference
# ----------------------------------------------------------------------------
def init_linear_block(key, input_dim, output_dim, norm='none'):
    kw, kb, kg = jax.random.split(key, 3)
    bound = 1.0 / float(input_dim) ** 0.5
    p = {
        'w': jax.random.uniform(kw, (output_dim, input_dim), jnp.float32, -bound, bound),
        'b': jax.random.uniform(kb, (output_dim,), jnp.float32, -bound, bound),
    }
    if norm == 'ln':
        p['gamma'] = jax.random.uniform(kg, (output_dim,), jnp.float32, 0.0, 1.0)
        p['beta'] = jnp.zeros((output_dim,), jnp.float32)
    return p


def linear_block_ref(x, params, norm, activation):
    y = x @ params['w'].T + params['b']
    if norm == 'ln':
        mean = jnp.mean(y, axis=1, keepdims=True)
        std = jnp.std(y, axis=1, ddof=1, keepdims=True)
        y = (y - mean) / (std + LN_EPS)
        y = y * params['gamma'][None, :] + params['beta'][None, :]
    if activation == 'relu':
        y = jnp.maximum(y, 0.0)
    elif activation == 'lrelu':
        y = jnp.where(y > 0, y, LRELU_SLOPE * y)
    elif activation == 'tanh':
        y = jnp.tanh(y)
    return y


if __name__ == "__main__":
    key = jax.random.PRNGKey(0)
    k_p1, k_p2, k_x = jax.random.split(key, 3)

    # Small but lane/sublane-aligned shapes: batch=64, in=128, out=256.
    batch, input_dim, output_dim = 64, 128, 256
    x = jax.random.normal(k_x, (batch, input_dim), jnp.float32)

    # Default LinearBlock config: norm='none', activation='relu'
    p_none = init_linear_block(k_p1, input_dim, output_dim, norm='none')
    f_none = jax.jit(functools.partial(linear_block, norm='none',
                                       activation='relu', block_m=32))
    out_none = jax.block_until_ready(f_none(x, p_none))

    # norm='ln', activation='tanh' exercises the fully fused norm+activation path
    p_ln = init_linear_block(k_p2, input_dim, output_dim, norm='ln')
    f_ln = jax.jit(functools.partial(linear_block, norm='ln',
                                     activation='tanh', block_m=32))
    out_ln = jax.block_until_ready(f_ln(x, p_ln))

    # Correctness vs pure-JAX f32 reference (bf16 MXU operands -> loose tolerance).
    ref_none = linear_block_ref(x, p_none, 'none', 'relu')
    ref_ln = linear_block_ref(x, p_ln, 'ln', 'tanh')

    assert out_none.shape == (batch, output_dim), out_none.shape
    assert out_ln.shape == (batch, output_dim), out_ln.shape
    assert bool(jnp.all(jnp.isfinite(out_none))) and bool(jnp.all(jnp.isfinite(out_ln)))
    assert bool(jnp.allclose(out_none, ref_none, rtol=2e-2, atol=2e-2))
    assert bool(jnp.allclose(out_ln, ref_ln, rtol=2e-2, atol=2e-2))

    print("KERNEL_OK")
</pallas_src>

<mosaic_0001>
module attributes {stable_mosaic.version = 11 : i64} {
  func.func @_linear_block_kernel(%arg0: i32, %arg1: memref<32x128xbf16, #tpu.memory_space<vmem>>, %arg2: memref<128x256xbf16, #tpu.memory_space<vmem>>, %arg3: memref<1x256xf32, #tpu.memory_space<vmem>>, %arg4: memref<32x256xf32, #tpu.memory_space<vmem>>) attributes {dimension_semantics = [#tpu.dimension_semantics<parallel>], iteration_bounds = array<i64: 2>, scalar_prefetch = 0 : i64, scratch_operands = 0 : i64, tpu.core_type = #tpu.core_type<tc>, window_params = [{transform_indices = @transform_0, window_bounds = array<i64: 32, 128>}, {pipeline_mode = #tpu.pipeline_mode<synchronous>, transform_indices = @transform_1, window_bounds = array<i64: 128, 256>}, {pipeline_mode = #tpu.pipeline_mode<synchronous>, transform_indices = @transform_2, window_bounds = array<i64: 1, 256>}, {transform_indices = @transform_3, window_bounds = array<i64: 32, 256>}]} {
    %c0 = arith.constant 0 : index
    %c0_0 = arith.constant 0 : index
    %0 = vector.load %arg1[%c0, %c0_0] : memref<32x128xbf16, #tpu.memory_space<vmem>>, vector<32x128xbf16>
    %c0_1 = arith.constant 0 : index
    %c0_2 = arith.constant 0 : index
    %1 = vector.load %arg2[%c0_1, %c0_2] : memref<128x256xbf16, #tpu.memory_space<vmem>>, vector<128x256xbf16>
    %cst = arith.constant dense<0.000000e+00> : vector<32x256xf32>
    %2 = tpu.matmul %0, %1, %cst {dimension_numbers = #tpu.dot_dimension_numbers<[1], [0], [0], [1], [0, 0, 1, 1], [], []>} : vector<32x128xbf16>, vector<128x256xbf16>, vector<32x256xf32> -> vector<32x256xf32>
    %c0_3 = arith.constant 0 : index
    %c0_4 = arith.constant 0 : index
    %3 = vector.load %arg3[%c0_3, %c0_4] : memref<1x256xf32, #tpu.memory_space<vmem>>, vector<1x256xf32>
    %4 = vector.broadcast %3 : vector<1x256xf32> to vector<32x256xf32>
    %5 = arith.addf %2, %4 : vector<32x256xf32>
    %cst_5 = arith.constant 0.000000e+00 : f32
    %6 = vector.broadcast %cst_5 : f32 to vector<32x256xf32>
    %7 = arith.maximumf %5, %6 : vector<32x256xf32>
    %c0_6 = arith.constant 0 : index
    %c0_7 = arith.constant 0 : index
    %8 = vector.load %arg4[%c0_6, %c0_7] : memref<32x256xf32, #tpu.memory_space<vmem>>, vector<32x256xf32>
    tpu.vector_store %arg4[%c0_6, %c0_7], %7 {strides = array<i32>} : memref<32x256xf32, #tpu.memory_space<vmem>>, vector<32x256xf32>,
    return
  }
  func.func @transform_0(%arg0: i32) -> (i32, i32) {
    %c0_i32 = arith.constant 0 : i32
    %c0_i32_0 = arith.constant 0 : i32
    return %arg0, %c0_i32 : i32, i32
  }
  func.func @transform_1(%arg0: i32) -> (i32, i32) {
    %c0_i32 = arith.constant 0 : i32
    %c0_i32_0 = arith.constant 0 : i32
    %c0_i32_1 = arith.constant 0 : i32
    return %c0_i32, %c0_i32_0 : i32, i32
  }
  func.func @transform_2(%arg0: i32) -> (i32, i32) {
    %c0_i32 = arith.constant 0 : i32
    %c0_i32_0 = arith.constant 0 : i32
    %c0_i32_1 = arith.constant 0 : i32
    return %c0_i32, %c0_i32_0 : i32, i32
  }
  func.func @transform_3(%arg0: i32) -> (i32, i32) {
    %c0_i32 = arith.constant 0 : i32
    %c0_i32_0 = arith.constant 0 : i32
    return %arg0, %c0_i32 : i32, i32
  }
}

</mosaic_0001>

<llo_original>
// kernel: linear_block.1
$region0: #{linear_block.1}
  #allocation0 [shape = 'u32[]', space=smem, size = 0x4, offset = 0x4, fixed_abs, tag = 'smem constant byte address 0x4 - core index']
  #allocation1 [shape = 'u32[144,128]{1,0:T(1,128)}', space=vmem, size = 0x12000, scoped, tag = 'internal scratch']
  %s0 = inlined_call_operand.vmem [shape: bf16[64,128], index: 0, kind: input, shape index: {}]
  %s1 = inlined_call_operand.vmem [shape: bf16[128,256], index: 1, kind: input, shape index: {}]
  %s2 = inlined_call_operand.vmem [shape: f32[1,256], index: 2, kind: input, shape index: {}]
  %s3 = inlined_call_operand.hbm [shape: f32[64,256], index: 3, kind: output, shape index: {}]
  %s4 = sld [smem:[#allocation0]]
  $region45: #{linear_block.1} parent=0
    _
  %s6 = ssub.s32 1, %s4
  %s7 = scalar_select 0, %s6, %s4
  $region1: #{linear_block.1} parent=0
    #allocation2 [shape = 'u8[65536]{0}', space=vmem, size = 0x10000, scoped, tag = 'output window, operand 0']
    #allocation3 [shape = 's32[2]{0}', space=sflag, size = 0x8, scoped, tag = 'scoped memory for linear_block.1']
    %8 = vsyncpa [#allocation3], 0
    %s9 = scalar_lea.sflag [#allocation3], 1
    %10 = vsyncpa %s9, 0
    loop: start=0, step=1, limit=4
    $region2: #{linear_block.1} parent=1 // loop_pre_header
      _
    $region3: #{linear_block.1} parent=1 // loop_header
      %s12 = sphi 0, %s16
      %p13 = scmp.ge.s32.totalorder %s12, 4
      %s22 = sphi 0, %s24
      %s25 = sphi 0, %s22
      %s26 = sphi 0, %s25
      %s42 = sphi 0, %s26
      %s46 = sphi 0, %s46
      %s48 = sphi 0, %s46
      %s49 = sphi 0, %s48
      %s63 = sphi 0, %s49
      %s67 = sphi 0, %s67
      %s69 = sphi 0, %s67
      %s70 = sphi 0, %s69
      %s84 = sphi 0, %s70
      %s90 = sphi 0, %s92
      %s93 = sphi 0, %s90
      %s94 = sphi 0, %s93
      %s110 = sphi 0, %s94
    $region4: #{linear_block.1} parent=1 // loop_header_branch
      %15 = sbr.rel (%p13) target = $region8
    $region5: #{linear_block.1} parent=1 // loop_body
      %s17 = ssub.s32 %s12, 1
      %s18 = ssub.s32 %s12, 2
      %s19 = sadd.s32 %s12, 1
      %s20 = ssub.s32 %s12, %s19
      %p21 = scmp.eq.s32.totalorder %s20, 0
      %s23 = sadd.s32 %s22, 1
      %s24 = scalar_select %p21, %s22, %s23
      %p27 = pneg %p21
      %p28 = scmp.eq.s32.totalorder %s12, 1
      %p29 = por %p27, %p28
      %p30 = scmp.ne.s32.totalorder %s22, %s25
      %p31 = scmp.eq.s32.totalorder %s12, 0
      %p32 = por %p30, %p31
      %p33 = scmp.ne.s32.totalorder %s22, %s25
      %p34 = scmp.eq.s32.totalorder %s17, 1
      %p35 = por %p33, %p34
      %p36 = scmp.ne.s32.totalorder %s25, %s26
      %p37 = scmp.eq.s32.totalorder %s17, 0
      %p38 = por %p36, %p37
      %p39 = scmp.ne.s32.totalorder %s25, %s26
      %p40 = scmp.eq.s32.totalorder %s18, 1
      %p41 = por %p39, %p40
      %p43 = scmp.ne.s32.totalorder %s26, %s42
      %p44 = scmp.eq.s32.totalorder %s18, 0
      %p45 = por %p43, %p44
      %s47 = sadd.s32 %s46, 1
      %p50 = scmp.eq.s32.totalorder %s12, 1
      %p51 = scmp.ne.s32.totalorder %s46, %s48
      %p52 = scmp.eq.s32.totalorder %s12, 0
      %p53 = por %p51, %p52
      %p54 = scmp.ne.s32.totalorder %s46, %s48
      %p55 = scmp.eq.s32.totalorder %s17, 1
      %p56 = por %p54, %p55
      %p57 = scmp.ne.s32.totalorder %s48, %s49
      %p58 = scmp.eq.s32.totalorder %s17, 0
      %p59 = por %p57, %p58
      %p60 = scmp.ne.s32.totalorder %s48, %s49
      %p61 = scmp.eq.s32.totalorder %s18, 1
      %p62 = por %p60, %p61
      %p64 = scmp.ne.s32.totalorder %s49, %s63
      %p65 = scmp.eq.s32.totalorder %s18, 0
      %p66 = por %p64, %p65
      %s68 = sadd.s32 %s67, 1
      %p71 = scmp.eq.s32.totalorder %s12, 1
      %p72 = scmp.ne.s32.totalorder %s67, %s69
      %p73 = scmp.eq.s32.totalorder %s12, 0
      %p74 = por %p72, %p73
      %p75 = scmp.ne.s32.totalorder %s67, %s69
      %p76 = scmp.eq.s32.totalorder %s17, 1
      %p77 = por %p75, %p76
      %p78 = scmp.ne.s32.totalorder %s69, %s70
      %p79 = scmp.eq.s32.totalorder %s17, 0
      %p80 = por %p78, %p79
      %p81 = scmp.ne.s32.totalorder %s69, %s70
      %p82 = scmp.eq.s32.totalorder %s18, 1
      %p83 = por %p81, %p82
      %p85 = scmp.ne.s32.totalorder %s70, %s84
      %p86 = scmp.eq.s32.totalorder %s18, 0
      %p87 = por %p85, %p86
      %s88 = ssub.s32 %s12, %s19
      %p89 = scmp.eq.s32.totalorder %s88, 0
      %s91 = sadd.s32 %s90, 1
      %s92 = scalar_select %p89, %s90, %s91
      %p95 = pneg %p89
      %p96 = scmp.eq.s32.totalorder %s12, 1
      %p97 = por %p95, %p96
      %p98 = scmp.ne.s32.totalorder %s90, %s93
      %p99 = scmp.eq.s32.totalorder %s12, 0
      %p100 = por %p98, %p99
      %p101 = scmp.ne.s32.totalorder %s90, %s93
      %p102 = scmp.eq.s32.totalorder %s17, 1
      %p103 = por %p101, %p102
      %p104 = scmp.ne.s32.totalorder %s93, %s94
      %p105 = scmp.eq.s32.totalorder %s17, 0
      %p106 = por %p104, %p105
      %p107 = scmp.ne.s32.totalorder %s93, %s94
      %p108 = scmp.eq.s32.totalorder %s18, 1
      %p109 = por %p107, %p108
      %p111 = scmp.ne.s32.totalorder %s94, %s110
      %p112 = scmp.eq.s32.totalorder %s18, 0
      %p113 = por %p111, %p112
      %p114 = scmp.le.s32.totalorder 1, %s12
      %p115 = scmp.lt.s32.totalorder %s12, 3
      %p116 = pnand %p114, %p115
      %p117 = pneg %p116
      // Predicated region
      $region9: #{linear_block.1} parent=5 // pred_check
        _
      $region10: #{linear_block.1} parent=5 // pred_check_branch
        %119 = sbr.rel (%p116) target = $region12
      $region11: #{linear_block.1} parent=5 // pred_region
        %s120 = ssub.s32 %s12, 1
        // Predicated region
        $region13: #{linear_block.1} parent=11 // pred_check
          %p121 = pneg %p59
        $region14: #{linear_block.1} parent=11 // pred_check_branch
          %123 = sbr.rel (%p121) target = $region16
        $region15: #{linear_block.1} parent=11 // pred_region
          _
        $region16: #{linear_block.1} parent=11 // pred_fallthru
          _
        // Predicated region
        $region17: #{linear_block.1} parent=11 // pred_check
          %p124 = pneg %p80
        $region18: #{linear_block.1} parent=11 // pred_check_branch
          %126 = sbr.rel (%p124) target = $region20
        $region19: #{linear_block.1} parent=11 // pred_region
          _
        $region20: #{linear_block.1} parent=11 // pred_fallthru
          _
      $region12: #{linear_block.1} parent=5 // pred_fallthru
        _
      %p127 = scmp.lt.s32.totalorder %s12, 2
      // Predicated region
      $region21: #{linear_block.1} parent=5 // pred_check
        %p128 = pneg %p127
      $region22: #{linear_block.1} parent=5 // pred_check_branch
        %130 = sbr.rel (%p128) target = $region24
      $region23: #{linear_block.1} parent=5 // pred_region
        // Predicated region
        $region25: #{linear_block.1} parent=23 // pred_check
          %p131 = pneg %p32
        $region26: #{linear_block.1} parent=23 // pred_check_branch
          %133 = sbr.rel (%p131) target = $region28
        $region27: #{linear_block.1} parent=23 // pred_region
          %s134 = smul.u32 4, %s12
          %p135 = scmp.lt.s32.totalorder %s134, 7
          %s136 = scalar_select %p135, %s134, 7
          %s137 = smul.addr %s136, 4
          %s138 = scalar_lea.vmem %s0, %s137
          %s139 = smul.u32 4, %s12
        $region28: #{linear_block.1} parent=23 // pred_fallthru
          _
      $region24: #{linear_block.1} parent=5 // pred_fallthru
        _
      %p140 = scmp.le.s32.totalorder 1, %s12
      %p141 = scmp.lt.s32.totalorder %s12, 3
      %p142 = pnand %p140, %p141
      %p143 = pneg %p142
      // Predicated region
      $region29: #{linear_block.1} parent=5 // pred_check
        _
      $region30: #{linear_block.1} parent=5 // pred_check_branch
        %145 = sbr.rel (%p142) target = $region32
      $region31: #{linear_block.1} parent=5 // pred_region
        %s146 = ssub.s32 %s12, 1
        %s147 = smul.u32 4, %s17
        %p148 = scmp.lt.s32.totalorder %s147, 7
        %s149 = scalar_select %p148, %s147, 7
        %s150 = smul.addr %s149, 4
        %s151 = scalar_lea.vmem %s0, %s150
        %p152 = pneg %p38
        %p153 = pneg %p35
        %p154 = pneg %p59
        %p155 = pneg %p56
        %p156 = pneg %p80
        %p157 = pneg %p77
        %p158 = pneg %p106
        %p159 = pneg %p103
        %s160 = sand.u32 %s93, 1
        %s161 = scalar_lea.sflag [#allocation3], %s160
        %s162 = sand.u32 %s93, 1
        %s163 = smul.addr %s162, 64
        %s164 = scalar_lea.vmem [#allocation2], %s163
        %s165 = smul.u32 4, %s17
        %p166 = scmp.lt.s32.totalorder %s165, 7
        %s167 = scalar_select %p166, %s165, 7
        %s168 = smul.addr %s167, 4
        %s169 = scalar_lea.vmem %s0, %s168
        %s170 = smul.u32 4, %s17
        %s171 = smul.u32 4, %s17
        %v173 = vld [vmem:[%s169] sm:$0xf]
        %v174 = vld [vmem:[%s169 + $0x4] sm:$0xf]
        %v175 = vld [vmem:[%s169 + $0x8] sm:$0xf]
        %v176 = vld [vmem:[%s169 + $0xc] sm:$0xf]
        %v177 = vld [vmem:[%s1] sm:$0xff]
        %v178 = vld [vmem:[%s1 + $0x8] sm:$0xff]
        %v179 = vld [vmem:[%s1 + $0x10] sm:$0xff]
        %v180 = vld [vmem:[%s1 + $0x18] sm:$0xff]
        %v181 = vld [vmem:[%s1 + $0x20] sm:$0xff]
        %v182 = vld [vmem:[%s1 + $0x28] sm:$0xff]
        %v183 = vld [vmem:[%s1 + $0x30] sm:$0xff]
        %v184 = vld [vmem:[%s1 + $0x38] sm:$0xff]
        %v185 = vld [vmem:[%s1 + $0x40] sm:$0xff]
        %v186 = vld [vmem:[%s1 + $0x48] sm:$0xff]
        %v187 = vld [vmem:[%s1 + $0x50] sm:$0xff]
        %v188 = vld [vmem:[%s1 + $0x58] sm:$0xff]
        %v189 = vld [vmem:[%s1 + $0x60] sm:$0xff]
        %v190 = vld [vmem:[%s1 + $0x68] sm:$0xff]
        %v191 = vld [vmem:[%s1 + $0x70] sm:$0xff]
        %v192 = vld [vmem:[%s1 + $0x78] sm:$0xff]
        %v193 = vld [vmem:[%s2] sm:$0x3]
        %v195 = vlaneseq
        %v196 = vshrl.u32 %v195, 7
        %v197 = vsub.s32 0, %v196
        %v198 = vrot.slane %v193, %v197
        %v199 = vlaneseq
        %v200 = vshrl.u32 %v199, 7
        %v201 = vsub.s32 1, %v200
        %v202 = vrot.slane %v193, %v201
        %v209 = vunpack.c.l.b16 %v173
        %v210 = vunpack.c.l.b16 %v174
        %v211 = vunpack.c.l.b16 %v175
        %v212 = vunpack.c.l.b16 %v176
        %v213 = vpack.c.b16 %v210, %v209
        %v214 = vpack.c.b16 %v212, %v211
        %v233 = vunpack.c.l.b16 %v177
        %v234 = vunpack.c.h.b16 %v177
        %v235 = vunpack.c.l.b16 %v178
        %v236 = vunpack.c.h.b16 %v178
        %v237 = vunpack.c.l.b16 %v179
        %v238 = vunpack.c.h.b16 %v179
        %v239 = vunpack.c.l.b16 %v180
        %v240 = vunpack.c.h.b16 %v180
        %v241 = vunpack.c.l.b16 %v181
        %v242 = vunpack.c.h.b16 %v181
        %v243 = vunpack.c.l.b16 %v182
        %v244 = vunpack.c.h.b16 %v182
        %v245 = vunpack.c.l.b16 %v183
        %v246 = vunpack.c.h.b16 %v183
        %v247 = vunpack.c.l.b16 %v184
        %v248 = vunpack.c.h.b16 %v184
        %v249 = vunpack.c.l.b16 %v185
        %v250 = vunpack.c.h.b16 %v185
        %v251 = vunpack.c.l.b16 %v186
        %v252 = vunpack.c.h.b16 %v186
        %v253 = vunpack.c.l.b16 %v187
        %v254 = vunpack.c.h.b16 %v187
        %v255 = vunpack.c.l.b16 %v188
        %v256 = vunpack.c.h.b16 %v188
        %v257 = vunpack.c.l.b16 %v189
        %v258 = vunpack.c.h.b16 %v189
        %v259 = vunpack.c.l.b16 %v190
        %v260 = vunpack.c.h.b16 %v190
        %v261 = vunpack.c.l.b16 %v191
        %v262 = vunpack.c.h.b16 %v191
        %v263 = vunpack.c.l.b16 %v192
        %v264 = vunpack.c.h.b16 %v192
        %v265 = vpack.c.b16 %v235, %v233
        %v266 = vpack.c.b16 %v236, %v234
        %v267 = vpack.c.b16 %v239, %v237
        %v268 = vpack.c.b16 %v240, %v238
        %v269 = vpack.c.b16 %v243, %v241
        %v270 = vpack.c.b16 %v244, %v242
        %v271 = vpack.c.b16 %v247, %v245
        %v272 = vpack.c.b16 %v248, %v246
        %v273 = vpack.c.b16 %v251, %v249
        %v274 = vpack.c.b16 %v252, %v250
        %v275 = vpack.c.b16 %v255, %v253
        %v276 = vpack.c.b16 %v256, %v254
        %v277 = vpack.c.b16 %v259, %v257
        %v278 = vpack.c.b16 %v260, %v258
        %v279 = vpack.c.b16 %v263, %v261
        %v280 = vpack.c.b16 %v264, %v262
        %297 = vmatprep.subr.bf16.mxu0 %v280
        %298 = vmatpush1.bf16.msra.mxu0 %v279
        %299 = vmatprep.subr.bf16.mxu0 %v278
        %300 = vmatpush1.bf16.msra.mxu0 %v277
        %301 = vmatprep.subr.bf16.mxu0 %v276
        %302 = vmatpush1.bf16.msra.mxu0 %v275
        %303 = vmatprep.subr.bf16.mxu0 %v274
        %304 = vmatpush1.bf16.msra.mxu0 %v273
        %305 = vmatprep.subr.bf16.mxu0 %v272
        %306 = vmatpush1.bf16.msra.mxu0 %v271
        %307 = vmatprep.subr.bf16.mxu0 %v270
        %308 = vmatpush1.bf16.msra.mxu0 %v269
        %309 = vmatprep.subr.bf16.mxu0 %v268
        %310 = vmatpush1.bf16.msra.mxu0 %v267
        %311 = vmatprep.subr.bf16.mxu0 %v266
        %312 = vmatpush1.bf16.msra.mxu0 %v265
        %313 = vmatprep.subr.bf16.mxu0 0
        %314 = vmatpush2.bf16.msra.mxu0 0
        %315 = vmatprep.subr.bf16.mxu0 0
        %316 = vmatpush2.bf16.msra.mxu0 0
        %317 = vmatprep.subr.bf16.mxu0 0
        %318 = vmatpush2.bf16.msra.mxu0 0
        %319 = vmatprep.subr.bf16.mxu0 0
        %320 = vmatpush2.bf16.msra.mxu0 0
        %321 = vmatprep.subr.bf16.mxu0 0
        %322 = vmatpush2.bf16.msra.mxu0 0
        %323 = vmatprep.subr.bf16.mxu0 0
        %324 = vmatpush2.bf16.msra.mxu0 0
        %325 = vmatprep.subr.bf16.mxu0 0
        %326 = vmatpush2.bf16.msra.mxu0 0
        %327 = vmatprep.subr.bf16.mxu0 0
        %328 = vmatpush2.bf16.msra.mxu0 0
        %329 = vmatprep.mubr.bf16.mxu0 0
        %330 = vmatmul.mubr.bf16.gmra.mxu0 %v213
        %v331 = vpop.f32.mrf.mxu0
        %v332 = vadd.f32 %v198, %v331
        %v333 = vpop.f32.mrf.mxu0
        %v334 = vadd.f32 %v202, %v333
        %v335 = vpop.f32.mrf.mxu0
        %v336 = vadd.f32 %v198, %v335
        %v337 = vpop.f32.mrf.mxu0
        %v338 = vadd.f32 %v202, %v337
        %339 = vmatprep.mubr.bf16.mxu0 0
        %340 = vmatmul.mubr.bf16.gmra.mxu0 %v214
        %v341 = vpop.f32.mrf.mxu0
        %v342 = vadd.f32 %v198, %v341
        %v343 = vpop.f32.mrf.mxu0
        %v344 = vadd.f32 %v202, %v343
        %v345 = vpop.f32.mrf.mxu0
        %v346 = vadd.f32 %v198, %v345
        %v347 = vpop.f32.mrf.mxu0
        %v348 = vadd.f32 %v202, %v347
        %349 = vdwg.mxu0
        %v350 = vmax.f32 %v332, 0.0
        %v351 = vmax.f32 %v334, 0.0
        %v352 = vmax.f32 %v336, 0.0
        %v353 = vmax.f32 %v338, 0.0
        %v354 = vmax.f32 %v342, 0.0
        %v355 = vmax.f32 %v344, 0.0
        %v356 = vmax.f32 %v346, 0.0
        %v357 = vmax.f32 %v348, 0.0
        %358 = vst [vmem:[%s164] sm:$0xff] %v350
        %359 = vst [vmem:[%s164 + $0x8] sm:$0xff] %v351
        %360 = vst [vmem:[%s164 + $0x10] sm:$0xff] %v352
        %361 = vst [vmem:[%s164 + $0x18] sm:$0xff] %v353
        %362 = vst [vmem:[%s164 + $0x20] sm:$0xff] %v354
        %363 = vst [vmem:[%s164 + $0x28] sm:$0xff] %v355
        %364 = vst [vmem:[%s164 + $0x30] sm:$0xff] %v356
        %365 = vst [vmem:[%s164 + $0x38] sm:$0xff] %v357
        %s366 = sand.u32 %s93, 1
        %s367 = scalar_lea.sflag [#allocation3], %s366
        %s368 = sand.u32 %s93, 1
        %s369 = smul.addr %s368, 64
        %s370 = scalar_lea.vmem [#allocation2], %s369
        // Predicated region
        $region33: #{linear_block.1} parent=31 // pred_check
          %p371 = pneg %p103
        $region34: #{linear_block.1} parent=31 // pred_check_branch
          %373 = sbr.rel (%p371) target = $region36
        $region35: #{linear_block.1} parent=31 // pred_region
          %s374 = smul.u32 4, %s17
          %s376 = ssub.s32 1024, 1024
          %377 = vsyncadd %s367, %s376
          %s378 = smul.addr %s374, 2
          %s379 = smul.addr %s378, 128
          %s380 = scalar_lea.hbm %s3, %s379
          %s381 = sshll.u32 %s370, 4
          %s382 = int_to_ptr.vmem [resolvable:$true] %s381
          %387 = dma.vmem_to_hbm [thread:$0]  %s382, 1024, %s380, %s367, 256, 256, 16
        $region36: #{linear_block.1} parent=31 // pred_fallthru
          _
      $region32: #{linear_block.1} parent=5 // pred_fallthru
        _
      %p388 = scmp.le.s32.totalorder 2, %s12
      // Predicated region
      $region37: #{linear_block.1} parent=5 // pred_check
        %p389 = pneg %p388
      $region38: #{linear_block.1} parent=5 // pred_check_branch
        %391 = sbr.rel (%p389) target = $region40
      $region39: #{linear_block.1} parent=5 // pred_region
        %s392 = ssub.s32 %s12, 2
        // Predicated region
        $region41: #{linear_block.1} parent=39 // pred_check
          %p393 = pneg %p109
        $region42: #{linear_block.1} parent=39 // pred_check_branch
          %395 = sbr.rel (%p393) target = $region44
        $region43: #{linear_block.1} parent=39 // pred_region
          %s396 = sand.u32 %s94, 1
          %s397 = scalar_lea.sflag [#allocation3], %s396
          %s398 = sand.u32 %s94, 1
          %s399 = smul.addr %s398, 64
          %s400 = scalar_lea.vmem [#allocation2], %s399
          %401 = dma.done %s397, 1024
        $region44: #{linear_block.1} parent=39 // pred_fallthru
          _
      $region40: #{linear_block.1} parent=5 // pred_fallthru
        _
    $region6: #{linear_block.1} parent=1 // loop_footer
      %s16 = sadd.s32 1, %s12
    $region7: #{linear_block.1} parent=1 // loop_footer_branch
      %11 = sbr.rel target = $region3
    $region8: #{linear_block.1} parent=1 // loop_exit
      _
    %402 = vsyncpa [#allocation3], 1
    %s403 = scalar_lea.sflag [#allocation3], 1
    %404 = vsyncpa %s403, 1

</llo_original>
